<compile_context>
chip_gen: v7x
topology: tpu7x:2x2x1
jax: 0.10.0
libtpu: 0.0.40
codegen_flags: <defaults>
</compile_context>

<pallas_src>
import jax
import jax.numpy as jnp
from jax.experimental import pallas as pl
from jax.experimental.pallas import tpu as pltpu


# ---- network hyper-parameters (the synthetic "native tcnn module") ----------
N_INPUT_DIMS = 32
WIDTH = 64
N_OUTPUT_DIMS = 16          # exposed output dims
PADDED_OUTPUT_DIMS = 16     # tcnn pads output to a multiple of 16
LOSS_SCALE = 1.0            # Fp32 param precision branch -> no-op
BATCH_GRANULARITY = 128     # tcnn batch granularity / minimum tile
MAX_BATCH_TILE = 8192       # big tiles amortize the ~0.35us/step grid overhead

_LAYER_MACS = N_INPUT_DIMS * WIDTH + WIDTH * WIDTH + WIDTH * PADDED_OUTPUT_DIMS


def _round_up(x, m):
    return ((x + m - 1) // m) * m


def _pick_batch_tile(batch_size):
    """Pick the batch tile.

    * >= 4 grid steps when the batch allows, so v7x's two TensorCores each get
      >= 2 steps (restores per-core double-buffering); v5e/v6e unaffected.
    * tile capped at MAX_BATCH_TILE (8192 rows ~ a few MiB of VMEM).
    * tile is a multiple of 8 (sublane) and never wider than the 8-row-rounded
      batch, so a block never exceeds the array extent.
    """
    if batch_size > 4 * BATCH_GRANULARITY:
        tile = (batch_size // 4) // BATCH_GRANULARITY * BATCH_GRANULARITY
        tile = max(BATCH_GRANULARITY, min(MAX_BATCH_TILE, tile))
    else:
        tile = BATCH_GRANULARITY
    return min(tile, _round_up(batch_size, 8))


def _mlp_kernel(x_ref, w0_ref, w1_ref, w2_ref, o_ref):
    """One batch tile: fused 3-layer MLP, bf16 MXU matmuls, f32 accum/ReLU."""
    # f32 rows arrive straight from HBM; quantize to bf16 in-register (MXU-
    # native rate).  Accumulation and the ReLUs stay f32 on the VPU.
    x = x_ref[...].astype(jnp.bfloat16)                            # [tb, Din]
    h = jnp.dot(x, w0_ref[...], preferred_element_type=jnp.float32)
    h = jnp.maximum(h, 0.0)                                        # ReLU (f32)
    h = jnp.dot(h.astype(jnp.bfloat16), w1_ref[...],
                preferred_element_type=jnp.float32)
    h = jnp.maximum(h, 0.0)                                        # ReLU (f32)
    out = jnp.dot(h.astype(jnp.bfloat16), w2_ref[...],
                  preferred_element_type=jnp.float32)
    o_ref[...] = out.astype(o_ref.dtype)                           # linear output


def prepare_params(w0, w1, w2):
    """One-time bf16 cast of the (tiny) weights; call once at module init."""
    return (w0.astype(jnp.bfloat16),
            w1.astype(jnp.bfloat16),
            w2.astype(jnp.bfloat16))


@jax.jit
def tcnn_module_forward(x, w0, w1, w2):
    """Equivalent of Module.forward: fused MLP -> unpad output.

    `w0/w1/w2` should be pre-cast to bf16 via prepare_params(); the astypes
    below are trace-time no-ops in that case.
    """
    batch_size = x.shape[0]

    x = x.astype(jnp.float32)          # x.to(torch.float); no-op if already f32
    w0 = w0.astype(jnp.bfloat16)
    w1 = w1.astype(jnp.bfloat16)
    w2 = w2.astype(jnp.bfloat16)

    tile = _pick_batch_tile(batch_size)
    grid = (pl.cdiv(batch_size, tile),)   # ragged last block handled by Pallas
                                          # (OOB rows masked; discarded below)

    flops = 2 * batch_size * _LAYER_MACS
    bytes_accessed = (batch_size * (N_INPUT_DIMS * 4 + PADDED_OUTPUT_DIMS * 4)
                      + 2 * _LAYER_MACS)  # f32 x in, f32 out, bf16 weights once

    out = pl.pallas_call(
        _mlp_kernel,
        out_shape=jax.ShapeDtypeStruct((batch_size, PADDED_OUTPUT_DIMS),
                                       jnp.float32),
        grid_spec=pl.GridSpec(
            grid=grid,
            in_specs=[
                pl.BlockSpec((tile, N_INPUT_DIMS), lambda i: (i, 0)),
                # Constant index maps: the ~14 KiB of weights are fetched once
                # and stay VMEM-resident across the whole grid.
                pl.BlockSpec((N_INPUT_DIMS, WIDTH), lambda i: (0, 0)),
                pl.BlockSpec((WIDTH, WIDTH), lambda i: (0, 0)),
                pl.BlockSpec((WIDTH, PADDED_OUTPUT_DIMS), lambda i: (0, 0)),
            ],
            out_specs=pl.BlockSpec((tile, PADDED_OUTPUT_DIMS), lambda i: (i, 0)),
        ),
        compiler_params=pltpu.CompilerParams(
            dimension_semantics=("parallel",)),
        cost_estimate=pl.CostEstimate(
            flops=flops, transcendentals=0, bytes_accessed=bytes_accessed),
    )(x, w0, w1, w2)

    # _unpad_output: x[:batch_size, :n_output_dims]; LOSS_SCALE==1.0 -> no-op.
    return out[:batch_size, :N_OUTPUT_DIMS]


def initial_params(seed=1337):
    """Deterministic synthetic stand-in for native_tcnn_module.initial_params."""
    key = jax.random.PRNGKey(seed)
    k0, k1, k2 = jax.random.split(key, 3)

    def xavier(k, shape):
        fan_in, fan_out = shape
        lim = (6.0 / (fan_in + fan_out)) ** 0.5
        return jax.random.uniform(k, shape, jnp.float32, -lim, lim)

    w0 = xavier(k0, (N_INPUT_DIMS, WIDTH))
    w1 = xavier(k1, (WIDTH, WIDTH))
    w2 = xavier(k2, (WIDTH, PADDED_OUTPUT_DIMS))
    return w0, w1, w2


def _reference_forward(x, w0, w1, w2):
    """Pure-JAX reference with the same bf16 operand quantization as the kernel."""
    hp = jax.lax.Precision.HIGHEST
    f32 = jnp.float32
    xb = x.astype(f32).astype(jnp.bfloat16).astype(f32)
    w0b = w0.astype(jnp.bfloat16).astype(f32)
    w1b = w1.astype(jnp.bfloat16).astype(f32)
    w2b = w2.astype(jnp.bfloat16).astype(f32)
    h = jnp.maximum(jnp.dot(xb, w0b, precision=hp), 0.0)
    h = jnp.maximum(jnp.dot(h.astype(jnp.bfloat16).astype(f32), w1b,
                            precision=hp), 0.0)
    out = jnp.dot(h.astype(jnp.bfloat16).astype(f32), w2b, precision=hp)
    return out[:, :N_OUTPUT_DIMS]


if __name__ == "__main__":
    key = jax.random.PRNGKey(0)
    k_a, k_b, k_c = jax.random.split(key, 3)

    w0, w1, w2 = initial_params(seed=1337)
    w0b, w1b, w2b = prepare_params(w0, w1, w2)   # one-time bf16 cast

    def check(x, name):
        out = jax.block_until_ready(tcnn_module_forward(x, w0b, w1b, w2b))
        assert out.shape == (x.shape[0], N_OUTPUT_DIMS), (name, out.shape)
        ref = _reference_forward(x, w0, w1, w2)
        assert jnp.allclose(out, ref, atol=2e-3, rtol=2e-3), \
            f"{name}: mismatch vs reference"

    # 1) small batch (8 rows): single partial block, tile shrinks to 8.
    check(jax.random.normal(k_a, (8, N_INPUT_DIMS), jnp.float32), "small")

    # 2) ragged batch (200 rows): grid = cdiv(200,128) = 2, masked last block.
    check(jax.random.normal(k_b, (200, N_INPUT_DIMS), jnp.float32), "ragged")

    # 3) larger aligned batch (1024 rows): tile = 256, 4 parallel grid steps.
    check(jax.random.normal(k_c, (1024, N_INPUT_DIMS), jnp.float32), "aligned")

    print("KERNEL_OK")
</pallas_src>

<mosaic_0001>
module attributes {stable_mosaic.version = 11 : i64} {
  func.func @_mlp_kernel(%arg0: i32, %arg1: memref<8x32xf32, #tpu.memory_space<vmem>>, %arg2: memref<32x64xbf16, #tpu.memory_space<vmem>>, %arg3: memref<64x64xbf16, #tpu.memory_space<vmem>>, %arg4: memref<64x16xbf16, #tpu.memory_space<vmem>>, %arg5: memref<8x16xf32, #tpu.memory_space<vmem>>) attributes {dimension_semantics = [#tpu.dimension_semantics<parallel>], iteration_bounds = array<i64: 1>, scalar_prefetch = 0 : i64, scratch_operands = 0 : i64, tpu.core_type = #tpu.core_type<tc>, window_params = [{transform_indices = @transform_0, window_bounds = array<i64: 8, 32>}, {pipeline_mode = #tpu.pipeline_mode<synchronous>, transform_indices = @transform_1, window_bounds = array<i64: 32, 64>}, {pipeline_mode = #tpu.pipeline_mode<synchronous>, transform_indices = @transform_2, window_bounds = array<i64: 64, 64>}, {pipeline_mode = #tpu.pipeline_mode<synchronous>, transform_indices = @transform_3, window_bounds = array<i64: 64, 16>}, {transform_indices = @transform_4, window_bounds = array<i64: 8, 16>}]} {
    %c0 = arith.constant 0 : index
    %c0_0 = arith.constant 0 : index
    %0 = vector.load %arg1[%c0, %c0_0] : memref<8x32xf32, #tpu.memory_space<vmem>>, vector<8x32xf32>
    %1 = arith.truncf %0 : vector<8x32xf32> to vector<8x32xbf16>
    %c0_1 = arith.constant 0 : index
    %c0_2 = arith.constant 0 : index
    %2 = vector.load %arg2[%c0_1, %c0_2] : memref<32x64xbf16, #tpu.memory_space<vmem>>, vector<32x64xbf16>
    %cst = arith.constant dense<0.000000e+00> : vector<8x64xf32>
    %3 = tpu.matmul %1, %2, %cst {dimension_numbers = #tpu.dot_dimension_numbers<[1], [0], [0], [1], [0, 0, 1, 1], [], []>} : vector<8x32xbf16>, vector<32x64xbf16>, vector<8x64xf32> -> vector<8x64xf32>
    %cst_3 = arith.constant 0.000000e+00 : f32
    %4 = vector.broadcast %cst_3 : f32 to vector<8x64xf32>
    %5 = arith.maximumf %3, %4 : vector<8x64xf32>
    %6 = arith.truncf %5 : vector<8x64xf32> to vector<8x64xbf16>
    %c0_4 = arith.constant 0 : index
    %c0_5 = arith.constant 0 : index
    %7 = vector.load %arg3[%c0_4, %c0_5] : memref<64x64xbf16, #tpu.memory_space<vmem>>, vector<64x64xbf16>
    %cst_6 = arith.constant dense<0.000000e+00> : vector<8x64xf32>
    %8 = tpu.matmul %6, %7, %cst_6 {dimension_numbers = #tpu.dot_dimension_numbers<[1], [0], [0], [1], [0, 0, 1, 1], [], []>} : vector<8x64xbf16>, vector<64x64xbf16>, vector<8x64xf32> -> vector<8x64xf32>
    %cst_7 = arith.constant 0.000000e+00 : f32
    %9 = vector.broadcast %cst_7 : f32 to vector<8x64xf32>
    %10 = arith.maximumf %8, %9 : vector<8x64xf32>
    %11 = arith.truncf %10 : vector<8x64xf32> to vector<8x64xbf16>
    %c0_8 = arith.constant 0 : index
    %c0_9 = arith.constant 0 : index
    %12 = vector.load %arg4[%c0_8, %c0_9] : memref<64x16xbf16, #tpu.memory_space<vmem>>, vector<64x16xbf16>
    %cst_10 = arith.constant dense<0.000000e+00> : vector<8x16xf32>
    %13 = tpu.matmul %11, %12, %cst_10 {dimension_numbers = #tpu.dot_dimension_numbers<[1], [0], [0], [1], [0, 0, 1, 1], [], []>} : vector<8x64xbf16>, vector<64x16xbf16>, vector<8x16xf32> -> vector<8x16xf32>
    %c0_11 = arith.constant 0 : index
    %c0_12 = arith.constant 0 : index
    %14 = vector.load %arg5[%c0_11, %c0_12] : memref<8x16xf32, #tpu.memory_space<vmem>>, vector<8x16xf32>
    tpu.vector_store %arg5[%c0_11, %c0_12], %13 {strides = array<i32>} : memref<8x16xf32, #tpu.memory_space<vmem>>, vector<8x16xf32>,
    return
  }
  func.func @transform_0(%arg0: i32) -> (i32, i32) {
    %c0_i32 = arith.constant 0 : i32
    %c0_i32_0 = arith.constant 0 : i32
    return %arg0, %c0_i32 : i32, i32
  }
  func.func @transform_1(%arg0: i32) -> (i32, i32) {
    %c0_i32 = arith.constant 0 : i32
    %c0_i32_0 = arith.constant 0 : i32
    %c0_i32_1 = arith.constant 0 : i32
    return %c0_i32, %c0_i32_0 : i32, i32
  }
  func.func @transform_2(%arg0: i32) -> (i32, i32) {
    %c0_i32 = arith.constant 0 : i32
    %c0_i32_0 = arith.constant 0 : i32
    %c0_i32_1 = arith.constant 0 : i32
    return %c0_i32, %c0_i32_0 : i32, i32
  }
  func.func @transform_3(%arg0: i32) -> (i32, i32) {
    %c0_i32 = arith.constant 0 : i32
    %c0_i32_0 = arith.constant 0 : i32
    %c0_i32_1 = arith.constant 0 : i32
    return %c0_i32, %c0_i32_0 : i32, i32
  }
  func.func @transform_4(%arg0: i32) -> (i32, i32) {
    %c0_i32 = arith.constant 0 : i32
    %c0_i32_0 = arith.constant 0 : i32
    return %arg0, %c0_i32 : i32, i32
  }
}

</mosaic_0001>

<llo_original>
// kernel: tcnn_module_forward.1
$region0: #{tcnn_module_forward.1}
  #allocation0 [shape = 'u32[]', space=smem, size = 0x4, offset = 0x4, fixed_abs, tag = 'smem constant byte address 0x4 - core index']
  #allocation1 [shape = 'u32[144,128]{1,0:T(1,128)}', space=vmem, size = 0x12000, scoped, tag = 'internal scratch']
  %s0 = inlined_call_operand.vmem [shape: f32[8,32], index: 0, kind: input, shape index: {}]
  %s1 = inlined_call_operand.hbm [shape: bf16[32,64], index: 1, kind: input, shape index: {}]
  %s2 = inlined_call_operand.vmem [shape: bf16[64,64], index: 2, kind: input, shape index: {}]
  %s3 = inlined_call_operand.vmem [shape: bf16[64,16], index: 3, kind: input, shape index: {}]
  %s4 = inlined_call_operand.hbm [shape: f32[8,16], index: 4, kind: output, shape index: {}]
  %s5 = sld [smem:[#allocation0]]
  $region30: #{tcnn_module_forward.1} parent=0
    _
  %s7 = ssub.s32 1, %s5
  %s8 = scalar_select 0, %s7, %s5
  $region1: #{tcnn_module_forward.1} parent=0
    #allocation2 [shape = 'u8[8192]{0}', space=vmem, size = 0x2000, scoped, tag = 'input window, operand 1, single buffered']
    #allocation3 [shape = 's32[1]{0}', space=sflag, size = 0x4, scoped, tag = 'scoped memory for tcnn_module_forward.1']
    #allocation4 [shape = 's32[1]{0}', space=sflag, size = 0x4, scoped, tag = 'scoped memory for tcnn_module_forward.1']
    #allocation5 [shape = 'u8[4096]{0}', space=vmem, size = 0x1000, scoped, tag = 'output window, operand 0, single buffered']
    %9 = vsyncpa [#allocation3], 0
    %10 = vsyncpa [#allocation4], 0
    // Predicated region
    $region2: #{tcnn_module_forward.1} parent=1 // pred_check
      _
    $region3: #{tcnn_module_forward.1} parent=1 // pred_check_branch
      %12 = sbr.rel (0) target = $region5
    $region4: #{tcnn_module_forward.1} parent=1 // pred_region
      _
    $region5: #{tcnn_module_forward.1} parent=1 // pred_fallthru
      _
    // Predicated region
    $region6: #{tcnn_module_forward.1} parent=1 // pred_check
      _
    $region7: #{tcnn_module_forward.1} parent=1 // pred_check_branch
      %14 = sbr.rel (0) target = $region9
    $region8: #{tcnn_module_forward.1} parent=1 // pred_region
      %s16 = ssub.s32 256, 256
      %17 = vsyncadd [#allocation3], %s16
      %s18 = sshll.u32 [#allocation2], 4
      %s19 = int_to_ptr.vmem [resolvable:$true] %s18
      %24 = dma.hbm_to_vmem [thread:$0]  %s1, 256, %s19, [#allocation3], 64, 64, 4
    $region9: #{tcnn_module_forward.1} parent=1 // pred_fallthru
      _
    // Predicated region
    $region10: #{tcnn_module_forward.1} parent=1 // pred_check
      _
    $region11: #{tcnn_module_forward.1} parent=1 // pred_check_branch
      %26 = sbr.rel (0) target = $region13
    $region12: #{tcnn_module_forward.1} parent=1 // pred_region
      _
    $region13: #{tcnn_module_forward.1} parent=1 // pred_fallthru
      _
    // Predicated region
    $region14: #{tcnn_module_forward.1} parent=1 // pred_check
      _
    $region15: #{tcnn_module_forward.1} parent=1 // pred_check_branch
      %28 = sbr.rel (0) target = $region17
    $region16: #{tcnn_module_forward.1} parent=1 // pred_region
      _
    $region17: #{tcnn_module_forward.1} parent=1 // pred_fallthru
      _
    // Predicated region
    $region18: #{tcnn_module_forward.1} parent=1 // pred_check
      _
    $region19: #{tcnn_module_forward.1} parent=1 // pred_check_branch
      %30 = sbr.rel (0) target = $region21
    $region20: #{tcnn_module_forward.1} parent=1 // pred_region
      %31 = dma.done [#allocation3], 256
    $region21: #{tcnn_module_forward.1} parent=1 // pred_fallthru
      _
    %v33 = vld [vmem:[%s0] sm:$0xff]
    %v34 = vpack.c.bf16 %v33, %v33
    %v35 = vld [vmem:[#allocation2] sm:$0xf]
    %v36 = vld [vmem:[#allocation2 + $0x4] sm:$0xf]
    %v37 = vld [vmem:[#allocation2 + $0x8] sm:$0xf]
    %v38 = vld [vmem:[#allocation2 + $0xc] sm:$0xf]
    %v43 = vunpack.c.l.b16 %v35
    %v44 = vunpack.c.l.b16 %v36
    %v45 = vunpack.c.l.b16 %v37
    %v46 = vunpack.c.l.b16 %v38
    %v47 = vpack.c.b16 %v44, %v43
    %v48 = vpack.c.b16 %v46, %v45
    %vm51 = vcmask 261120
    %v53 = vsel %vm51, %v34, 0
    %55 = vmatprep.subr.bf16.mxu0 0
    %56 = vmatpush1.bf16.msra.mxu0 %v47
    %57 = vmatprep.subr.bf16.mxu0 0
    %58 = vmatpush1.bf16.msra.mxu0 %v48
    %59 = vmatprep.subr.bf16.mxu0 0
    %60 = vmatpush1.bf16.msra.mxu0 0
    %61 = vmatprep.subr.bf16.mxu0 0
    %62 = vmatpush1.bf16.msra.mxu0 0
    %63 = vmatprep.subr.bf16.mxu0 0
    %64 = vmatpush1.bf16.msra.mxu0 0
    %65 = vmatprep.subr.bf16.mxu0 0
    %66 = vmatpush1.bf16.msra.mxu0 0
    %67 = vmatprep.subr.bf16.mxu0 0
    %68 = vmatpush1.bf16.msra.mxu0 0
    %69 = vmatprep.subr.bf16.mxu0 0
    %70 = vmatpush1.bf16.msra.mxu0 0
    %71 = vmatprep.subr.bf16.mxu0 0
    %72 = vmatpush1.bf16.msra.mxu0 0
    %73 = vmatprep.subr.bf16.mxu0 0
    %74 = vmatpush1.bf16.msra.mxu0 0
    %75 = vmatprep.subr.bf16.mxu0 0
    %76 = vmatpush1.bf16.msra.mxu0 0
    %77 = vmatprep.subr.bf16.mxu0 0
    %78 = vmatpush1.bf16.msra.mxu0 0
    %79 = vmatprep.subr.bf16.mxu0 0
    %80 = vmatpush1.bf16.msra.mxu0 0
    %81 = vmatprep.subr.bf16.mxu0 0
    %82 = vmatpush1.bf16.msra.mxu0 0
    %83 = vmatprep.subr.bf16.mxu0 0
    %84 = vmatpush1.bf16.msra.mxu0 0
    %85 = vmatprep.subr.bf16.mxu0 0
    %86 = vmatpush1.bf16.msra.mxu0 0
    %87 = vmatprep.mubr.bf16.mxu0 0
    %88 = vmatmul.mubr.bf16.gmra.mrb[0].mxu0 %v53
    %v89 = vpop.f32.mrb[0].mxu0
    %v90 = vadd.f32 0.0, %v89
    %v91 = vpop.f32.mrb[0].mxu0
    %v92 = vpop.f32.mrb[0].mxu0
    %v93 = vpop.f32.mrb[0].mxu0
    %94 = vdwg.mxu0
    %v95 = vmax.f32 %v90, 0.0
    %v96 = vpack.c.bf16 %v95, %v95
    %v97 = vld [vmem:[%s2] sm:$0xf]
    %v98 = vld [vmem:[%s2 + $0x4] sm:$0xf]
    %v99 = vld [vmem:[%s2 + $0x8] sm:$0xf]
    %v100 = vld [vmem:[%s2 + $0xc] sm:$0xf]
    %v101 = vld [vmem:[%s2 + $0x10] sm:$0xf]
    %v102 = vld [vmem:[%s2 + $0x14] sm:$0xf]
    %v103 = vld [vmem:[%s2 + $0x18] sm:$0xf]
    %v104 = vld [vmem:[%s2 + $0x1c] sm:$0xf]
    %v113 = vunpack.c.l.b16 %v97
    %v114 = vunpack.c.l.b16 %v98
    %v115 = vunpack.c.l.b16 %v99
    %v116 = vunpack.c.l.b16 %v100
    %v117 = vunpack.c.l.b16 %v101
    %v118 = vunpack.c.l.b16 %v102
    %v119 = vunpack.c.l.b16 %v103
    %v120 = vunpack.c.l.b16 %v104
    %v121 = vpack.c.b16 %v114, %v113
    %v122 = vpack.c.b16 %v116, %v115
    %v123 = vpack.c.b16 %v118, %v117
    %v124 = vpack.c.b16 %v120, %v119
    %vm129 = vcmask 523264
    %v131 = vsel %vm129, %v96, 0
    %133 = vmatprep.subr.bf16.mxu0 0
    %134 = vmatpush1.bf16.msra.mxu0 %v121
    %135 = vmatprep.subr.bf16.mxu0 0
    %136 = vmatpush1.bf16.msra.mxu0 %v122
    %137 = vmatprep.subr.bf16.mxu0 0
    %138 = vmatpush1.bf16.msra.mxu0 %v123
    %139 = vmatprep.subr.bf16.mxu0 0
    %140 = vmatpush1.bf16.msra.mxu0 %v124
    %141 = vmatprep.subr.bf16.mxu0 0
    %142 = vmatpush1.bf16.msra.mxu0 0
    %143 = vmatprep.subr.bf16.mxu0 0
    %144 = vmatpush1.bf16.msra.mxu0 0
    %145 = vmatprep.subr.bf16.mxu0 0
    %146 = vmatpush1.bf16.msra.mxu0 0
    %147 = vmatprep.subr.bf16.mxu0 0
    %148 = vmatpush1.bf16.msra.mxu0 0
    %149 = vmatprep.subr.bf16.mxu0 0
    %150 = vmatpush1.bf16.msra.mxu0 0
    %151 = vmatprep.subr.bf16.mxu0 0
    %152 = vmatpush1.bf16.msra.mxu0 0
    %153 = vmatprep.subr.bf16.mxu0 0
    %154 = vmatpush1.bf16.msra.mxu0 0
    %155 = vmatprep.subr.bf16.mxu0 0
    %156 = vmatpush1.bf16.msra.mxu0 0
    %157 = vmatprep.subr.bf16.mxu0 0
    %158 = vmatpush1.bf16.msra.mxu0 0
    %159 = vmatprep.subr.bf16.mxu0 0
    %160 = vmatpush1.bf16.msra.mxu0 0
    %161 = vmatprep.subr.bf16.mxu0 0
    %162 = vmatpush1.bf16.msra.mxu0 0
    %163 = vmatprep.subr.bf16.mxu0 0
    %164 = vmatpush1.bf16.msra.mxu0 0
    %165 = vmatprep.mubr.bf16.mxu0 0
    %166 = vmatmul.mubr.bf16.gmra.mrb[0].mxu0 %v131
    %v167 = vpop.f32.mrb[0].mxu0
    %v168 = vadd.f32 0.0, %v167
    %v169 = vpop.f32.mrb[0].mxu0
    %v170 = vpop.f32.mrb[0].mxu0
    %v171 = vpop.f32.mrb[0].mxu0
    %172 = vdwg.mxu0
    %v173 = vmax.f32 %v168, 0.0
    %v174 = vpack.c.bf16 %v173, %v173
    %v175 = vld [vmem:[%s3] sm:$0xf]
    %v176 = vld [vmem:[%s3 + $0x4] sm:$0xf]
    %v177 = vld [vmem:[%s3 + $0x8] sm:$0xf]
    %v178 = vld [vmem:[%s3 + $0xc] sm:$0xf]
    %v179 = vld [vmem:[%s3 + $0x10] sm:$0xf]
    %v180 = vld [vmem:[%s3 + $0x14] sm:$0xf]
    %v181 = vld [vmem:[%s3 + $0x18] sm:$0xf]
    %v182 = vld [vmem:[%s3 + $0x1c] sm:$0xf]
    %v191 = vunpack.c.l.b16 %v175
    %v192 = vunpack.c.l.b16 %v176
    %v193 = vunpack.c.l.b16 %v177
    %v194 = vunpack.c.l.b16 %v178
    %v195 = vunpack.c.l.b16 %v179
    %v196 = vunpack.c.l.b16 %v180
    %v197 = vunpack.c.l.b16 %v181
    %v198 = vunpack.c.l.b16 %v182
    %v199 = vpack.c.b16 %v192, %v191
    %v200 = vpack.c.b16 %v194, %v193
    %v201 = vpack.c.b16 %v196, %v195
    %v202 = vpack.c.b16 %v198, %v197
    %v208 = vsel %vm129, %v174, 0
    %210 = vmatprep.subr.bf16.mxu0 0
    %211 = vmatpush1.bf16.msra.mxu0 %v199
    %212 = vmatprep.subr.bf16.mxu0 0
    %213 = vmatpush1.bf16.msra.mxu0 %v200
    %214 = vmatprep.subr.bf16.mxu0 0
    %215 = vmatpush1.bf16.msra.mxu0 %v201
    %216 = vmatprep.subr.bf16.mxu0 0
    %217 = vmatpush1.bf16.msra.mxu0 %v202
    %218 = vmatprep.subr.bf16.mxu0 0
    %219 = vmatpush1.bf16.msra.mxu0 0
    %220 = vmatprep.subr.bf16.mxu0 0
    %221 = vmatpush1.bf16.msra.mxu0 0
    %222 = vmatprep.subr.bf16.mxu0 0
    %223 = vmatpush1.bf16.msra.mxu0 0
    %224 = vmatprep.subr.bf16.mxu0 0
    %225 = vmatpush1.bf16.msra.mxu0 0
    %226 = vmatprep.subr.bf16.mxu0 0
    %227 = vmatpush1.bf16.msra.mxu0 0
    %228 = vmatprep.subr.bf16.mxu0 0
    %229 = vmatpush1.bf16.msra.mxu0 0
    %230 = vmatprep.subr.bf16.mxu0 0
    %231 = vmatpush1.bf16.msra.mxu0 0
    %232 = vmatprep.subr.bf16.mxu0 0
    %233 = vmatpush1.bf16.msra.mxu0 0
    %234 = vmatprep.subr.bf16.mxu0 0
    %235 = vmatpush1.bf16.msra.mxu0 0
    %236 = vmatprep.subr.bf16.mxu0 0
    %237 = vmatpush1.bf16.msra.mxu0 0
    %238 = vmatprep.subr.bf16.mxu0 0
    %239 = vmatpush1.bf16.msra.mxu0 0
    %240 = vmatprep.subr.bf16.mxu0 0
    %241 = vmatpush1.bf16.msra.mxu0 0
    %242 = vmatprep.mubr.bf16.mxu0 0
    %243 = vmatmul.mubr.bf16.gmra.mrb[0].mxu0 %v208
    %v244 = vpop.f32.mrb[0].mxu0
    %v245 = vadd.f32 0.0, %v244
    %v246 = vpop.f32.mrb[0].mxu0
    %v247 = vpop.f32.mrb[0].mxu0
    %v248 = vpop.f32.mrb[0].mxu0
    %249 = vdwg.mxu0
    %vm250 = vcmask 130048
    %251 = vst.msk [vmem:[#allocation5] sm:$0xff] %vm250, %v245
    // Predicated region
    $region22: #{tcnn_module_forward.1} parent=1 // pred_check
      _
    $region23: #{tcnn_module_forward.1} parent=1 // pred_check_branch
      %253 = sbr.rel (0) target = $region25
    $region24: #{tcnn_module_forward.1} parent=1 // pred_region
      %s255 = ssub.s32 128, 128
      %256 = vsyncadd [#allocation4], %s255
      %s258 = sshll.u32 [#allocation5], 4
      %s259 = int_to_ptr.vmem [resolvable:$true] %s258
      %261 = dma.vmem_to_hbm [thread:$0]  %s259, 128, %s4, [#allocation4]
    $region25: #{tcnn_module_forward.1} parent=1 // pred_fallthru
      _
    // Predicated region
    $region26: #{tcnn_module_forward.1} parent=1 // pred_check
      _
    $region27: #{tcnn_module_forward.1} parent=1 // pred_check_branch
      %263 = sbr.rel (0) target = $region29
    $region28: #{tcnn_module_forward.1} parent=1 // pred_region
      %264 = dma.done [#allocation4], 128
    $region29: #{tcnn_module_forward.1} parent=1 // pred_fallthru
      _
    %265 = vsyncpa [#allocation3], 1
    %266 = vsyncpa [#allocation4], 1

</llo_original>
